<compile_context>
chip_gen: v6e
topology: v6e:2x2x1
jax: 0.10.0
libtpu: 0.0.40
codegen_flags: <defaults>
</compile_context>

<pallas_src>
import jax
import jax.numpy as jnp
from jax import lax
from jax.experimental import pallas as pl
from jax.experimental.pallas import tpu as pltpu


def _round_up(x, m):
    return (x + m - 1) // m * m


def _linear_kernel(x_ref, w_ref, b_ref, o_ref, acc_ref):
    # x_ref: (tm, tk), w_ref: (tn, tk), b_ref: (1, tn), o_ref: (tm, tn)
    k = pl.program_id(2)

    @pl.when(k == 0)
    def _():
        # Fold the bias into the accumulator init (one broadcast per output
        # tile instead of an epilogue add).
        acc_ref[...] = jnp.broadcast_to(
            b_ref[...].astype(jnp.float32), acc_ref.shape
        )

    # Contract the feature axis of both operands: x (tm, tk) . W (tn, tk)^T.
    acc_ref[...] += lax.dot_general(
        x_ref[...],
        w_ref[...],
        dimension_numbers=(((1,), (1,)), ((), ())),
        preferred_element_type=jnp.float32,
    )

    @pl.when(k == pl.num_programs(2) - 1)
    def _():
        o_ref[...] = acc_ref[...].astype(o_ref.dtype)


def logistic_regression_forward(x, weight, bias, *, tm=256, tn=256, tk=256):
    """y = x @ weight.T + bias  (weight is (n_way, n_feature), like torch)."""
    M, K = x.shape
    N = weight.shape[0]

    # Tile sizes: cap at the (hardware-rounded) problem size.
    #   M tile -> multiple of 8 (sublane), N/K tiles -> multiples of 128 (lane).
    tm = min(tm, _round_up(M, 8))
    tn = min(tn, _round_up(N, 128))
    tk = min(tk, _round_up(K, 128))

    Mp = _round_up(M, tm)
    Kp = _round_up(K, tk)
    Np = _round_up(N, tn)

    # Zero-pad to lane-dense shapes. Zero K-padding contributes 0 to the dot;
    # zero N-padding (extra rows of W / entries of b) is sliced off afterwards.
    xp = x if (Mp, Kp) == (M, K) else jnp.pad(x, ((0, Mp - M), (0, Kp - K)))
    wp = weight if (Np, Kp) == (N, K) else jnp.pad(
        weight, ((0, Np - N), (0, Kp - K))
    )
    bp = bias if Np == N else jnp.pad(bias, (0, Np - N))
    bp = bp.reshape(1, Np)

    grid = (Mp // tm, Np // tn, Kp // tk)

    out = pl.pallas_call(
        _linear_kernel,
        out_shape=jax.ShapeDtypeStruct((Mp, Np), x.dtype),
        grid_spec=pltpu.PrefetchScalarGridSpec(
            num_scalar_prefetch=0,
            grid=grid,
            in_specs=[
                pl.BlockSpec((tm, tk), lambda i, j, k: (i, k)),   # x
                pl.BlockSpec((tn, tk), lambda i, j, k: (j, k)),   # weight (N,K)
                pl.BlockSpec((1, tn), lambda i, j, k: (0, j)),    # bias
            ],
            out_specs=pl.BlockSpec((tm, tn), lambda i, j, k: (i, j)),
            scratch_shapes=[pltpu.VMEM((tm, tn), jnp.float32)],
        ),
        compiler_params=pltpu.CompilerParams(
            dimension_semantics=("parallel", "parallel", "arbitrary"),
        ),
    )(xp, wp, bp)

    if (Mp, Np) != (M, N):
        out = out[:M, :N]
    return out


if __name__ == "__main__":
    # Small shapes consistent with the module: n_feature=32, n_way=8, batch=16.
    batch, n_feature, n_way = 16, 32, 8

    key = jax.random.PRNGKey(0)
    kx, kw, kb = jax.random.split(key, 3)

    # Deterministic param init mimicking nn.Linear's U(-1/sqrt(K), 1/sqrt(K)).
    bound = 1.0 / jnp.sqrt(jnp.float32(n_feature))
    weight = jax.random.uniform(kw, (n_way, n_feature), jnp.float32, -bound, bound)
    bias = jax.random.uniform(kb, (n_way,), jnp.float32, -bound, bound)

    x = jax.random.normal(kx, (batch, n_feature), jnp.float32)

    out = logistic_regression_forward(x, weight, bias)
    out = jax.block_until_ready(out)

    # Reference check in plain JAX (same math as torch's F.linear).
    ref = x @ weight.T + bias
    assert out.shape == (batch, n_way)
    assert jnp.allclose(out, ref, atol=1e-5, rtol=1e-5)

    print("KERNEL_OK")
</pallas_src>

<mosaic_0001>
module attributes {stable_mosaic.version = 11 : i64} {
  func.func @_linear_kernel(%arg0: i32, %arg1: i32, %arg2: i32, %arg3: memref<16x128xf32, #tpu.memory_space<vmem>>, %arg4: memref<128x128xf32, #tpu.memory_space<vmem>>, %arg5: memref<1x128xf32, #tpu.memory_space<vmem>>, %arg6: memref<16x128xf32, #tpu.memory_space<vmem>>, %arg7: memref<16x128xf32, #tpu.memory_space<vmem>>) attributes {dimension_semantics = [#tpu.dimension_semantics<parallel>, #tpu.dimension_semantics<parallel>, #tpu.dimension_semantics<arbitrary>], iteration_bounds = array<i64: 1, 1, 1>, scalar_prefetch = 0 : i64, scratch_operands = 1 : i64, tpu.core_type = #tpu.core_type<tc>, window_params = [{transform_indices = @transform_0, window_bounds = array<i64: 16, 128>}, {transform_indices = @transform_1, window_bounds = array<i64: 128, 128>}, {transform_indices = @transform_2, window_bounds = array<i64: 1, 128>}, {transform_indices = @transform_3, window_bounds = array<i64: 16, 128>}]} {
    %c0_i32 = arith.constant 0 : i32
    %0 = arith.cmpi eq, %arg2, %c0_i32 : i32
    %1 = arith.extui %0 : i1 to i32
    %c0_i32_0 = arith.constant 0 : i32
    %2 = arith.cmpi ne, %1, %c0_i32_0 : i32
    scf.if %2 {
      %c0_10 = arith.constant 0 : index
      %c0_11 = arith.constant 0 : index
      %12 = vector.load %arg5[%c0_10, %c0_11] : memref<1x128xf32, #tpu.memory_space<vmem>>, vector<1x128xf32>
      %13 = vector.shape_cast %12 : vector<1x128xf32> to vector<1x128xf32>
      %14 = vector.broadcast %13 : vector<1x128xf32> to vector<16x128xf32>
      %c0_12 = arith.constant 0 : index
      %c0_13 = arith.constant 0 : index
      %15 = vector.load %arg7[%c0_12, %c0_13] : memref<16x128xf32, #tpu.memory_space<vmem>>, vector<16x128xf32>
      tpu.vector_store %arg7[%c0_12, %c0_13], %14 {strides = array<i32>} : memref<16x128xf32, #tpu.memory_space<vmem>>, vector<16x128xf32>,
    } else {
    }
    %c0 = arith.constant 0 : index
    %c0_1 = arith.constant 0 : index
    %3 = vector.load %arg7[%c0, %c0_1] : memref<16x128xf32, #tpu.memory_space<vmem>>, vector<16x128xf32>
    %c0_2 = arith.constant 0 : index
    %c0_3 = arith.constant 0 : index
    %4 = vector.load %arg3[%c0_2, %c0_3] : memref<16x128xf32, #tpu.memory_space<vmem>>, vector<16x128xf32>
    %c0_4 = arith.constant 0 : index
    %c0_5 = arith.constant 0 : index
    %5 = vector.load %arg4[%c0_4, %c0_5] : memref<128x128xf32, #tpu.memory_space<vmem>>, vector<128x128xf32>
    %cst = arith.constant dense<0.000000e+00> : vector<16x128xf32>
    %6 = tpu.matmul %4, %5, %cst {dimension_numbers = #tpu.dot_dimension_numbers<[1], [1], [0], [0], [0, 0, 1, 0], [], []>} : vector<16x128xf32>, vector<128x128xf32>, vector<16x128xf32> -> vector<16x128xf32>
    %7 = arith.addf %3, %6 : vector<16x128xf32>
    %c0_6 = arith.constant 0 : index
    %c0_7 = arith.constant 0 : index
    %8 = vector.load %arg7[%c0_6, %c0_7] : memref<16x128xf32, #tpu.memory_space<vmem>>, vector<16x128xf32>
    tpu.vector_store %arg7[%c0_6, %c0_7], %7 {strides = array<i32>} : memref<16x128xf32, #tpu.memory_space<vmem>>, vector<16x128xf32>,
    %c0_i32_8 = arith.constant 0 : i32
    %9 = arith.cmpi eq, %arg2, %c0_i32_8 : i32
    %10 = arith.extui %9 : i1 to i32
    %c0_i32_9 = arith.constant 0 : i32
    %11 = arith.cmpi ne, %10, %c0_i32_9 : i32
    scf.if %11 {
      %c0_10 = arith.constant 0 : index
      %c0_11 = arith.constant 0 : index
      %12 = vector.load %arg7[%c0_10, %c0_11] : memref<16x128xf32, #tpu.memory_space<vmem>>, vector<16x128xf32>
      %c0_12 = arith.constant 0 : index
      %c0_13 = arith.constant 0 : index
      %13 = vector.load %arg6[%c0_12, %c0_13] : memref<16x128xf32, #tpu.memory_space<vmem>>, vector<16x128xf32>
      tpu.vector_store %arg6[%c0_12, %c0_13], %12 {strides = array<i32>} : memref<16x128xf32, #tpu.memory_space<vmem>>, vector<16x128xf32>,
    } else {
    }
    return
  }
  func.func @transform_0(%arg0: i32, %arg1: i32, %arg2: i32) -> (i32, i32) {
    %c0_i32 = arith.constant 0 : i32
    return %arg0, %arg2 : i32, i32
  }
  func.func @transform_1(%arg0: i32, %arg1: i32, %arg2: i32) -> (i32, i32) {
    %c0_i32 = arith.constant 0 : i32
    return %arg1, %arg2 : i32, i32
  }
  func.func @transform_2(%arg0: i32, %arg1: i32, %arg2: i32) -> (i32, i32) {
    %c0_i32 = arith.constant 0 : i32
    %c0_i32_0 = arith.constant 0 : i32
    return %c0_i32, %arg1 : i32, i32
  }
  func.func @transform_3(%arg0: i32, %arg1: i32, %arg2: i32) -> (i32, i32) {
    %c0_i32 = arith.constant 0 : i32
    return %arg0, %arg1 : i32, i32
  }
}

</mosaic_0001>

<llo_original>
// kernel: tpu_custom_call.1
$region0: #{tpu_custom_call.1}
  #allocation0 [shape = 'u32[]', space=smem, size = 0x4, offset = 0x4, fixed_abs, tag = 'smem constant byte address 0x4 - core index']
  #allocation1 [shape = 'u32[144,128]{1,0:T(1,128)}', space=vmem, size = 0x12000, scoped, tag = 'internal scratch']
  #allocation2 [shape = 'f32[16,128]{1,0:T(8,128)}', space=vmem, size = 0x2000, scoped, tag = 'scratch operand']
  %s0 = inlined_call_operand.hbm [shape: f32[16,128], index: 0, kind: input, shape index: {}]
  %s1 = inlined_call_operand.hbm [shape: f32[128,128], index: 1, kind: input, shape index: {}]
  %s2 = inlined_call_operand.vmem [shape: f32[1,128], index: 2, kind: input, shape index: {}]
  %s3 = inlined_call_operand.hbm [shape: f32[16,128], index: 3, kind: output, shape index: {}]
  %s4 = sld [smem:[#allocation0]]
  $region38: #{tpu_custom_call.1} parent=0
    _
  %s6 = ssub.s32 1, %s4
  %s7 = scalar_select 0, %s6, %s4
  $region1: #{tpu_custom_call.1} parent=0
    #allocation3 [shape = 'u8[8192]{0}', space=vmem, size = 0x2000, scoped, tag = 'input window, operand 0, single buffered']
    #allocation4 [shape = 's32[1]{0}', space=sflag, size = 0x4, scoped, tag = 'scoped memory for tpu_custom_call.1']
    #allocation5 [shape = 's32[1]{0}', space=sflag, size = 0x4, scoped, tag = 'scoped memory for tpu_custom_call.1']
    #allocation6 [shape = 'u8[65536]{0}', space=vmem, size = 0x10000, scoped, tag = 'input window, operand 1, single buffered']
    #allocation7 [shape = 's32[1]{0}', space=sflag, size = 0x4, scoped, tag = 'scoped memory for tpu_custom_call.1']
    #allocation8 [shape = 'u8[8192]{0}', space=vmem, size = 0x2000, scoped, tag = 'output window, operand 0, single buffered']
    %8 = vsyncpa [#allocation4], 0
    %9 = vsyncpa [#allocation7], 0
    %10 = vsyncpa [#allocation5], 0
    // Predicated region
    $region2: #{tpu_custom_call.1} parent=1 // pred_check
      _
    $region3: #{tpu_custom_call.1} parent=1 // pred_check_branch
      %12 = sbr.rel (0) target = $region5
    $region4: #{tpu_custom_call.1} parent=1 // pred_region
      %s14 = ssub.s32 256, 256
      %15 = vsyncadd [#allocation4], %s14
      %s16 = sshll.u32 [#allocation3], 4
      %s17 = int_to_ptr.vmem [resolvable:$true] %s16
      %22 = dma.hbm_to_vmem [thread:$0]  %s0, 256, %s17, [#allocation4], 128, 128, 8
    $region5: #{tpu_custom_call.1} parent=1 // pred_fallthru
      _
    // Predicated region
    $region6: #{tpu_custom_call.1} parent=1 // pred_check
      _
    $region7: #{tpu_custom_call.1} parent=1 // pred_check_branch
      %24 = sbr.rel (0) target = $region9
    $region8: #{tpu_custom_call.1} parent=1 // pred_region
      %s26 = ssub.s32 2048, 2048
      %27 = vsyncadd [#allocation7], %s26
      %s28 = sshll.u32 [#allocation6], 4
      %s29 = int_to_ptr.vmem [resolvable:$true] %s28
      %34 = dma.hbm_to_vmem [thread:$0]  %s1, 2048, %s29, [#allocation7], 128, 128, 8
    $region9: #{tpu_custom_call.1} parent=1 // pred_fallthru
      _
    // Predicated region
    $region10: #{tpu_custom_call.1} parent=1 // pred_check
      _
    $region11: #{tpu_custom_call.1} parent=1 // pred_check_branch
      %36 = sbr.rel (0) target = $region13
    $region12: #{tpu_custom_call.1} parent=1 // pred_region
      _
    $region13: #{tpu_custom_call.1} parent=1 // pred_fallthru
      _
    // Predicated region
    $region14: #{tpu_custom_call.1} parent=1 // pred_check
      _
    $region15: #{tpu_custom_call.1} parent=1 // pred_check_branch
      %38 = sbr.rel (0) target = $region17
    $region16: #{tpu_custom_call.1} parent=1 // pred_region
      %39 = dma.done [#allocation4], 256
    $region17: #{tpu_custom_call.1} parent=1 // pred_fallthru
      _
    // Predicated region
    $region18: #{tpu_custom_call.1} parent=1 // pred_check
      _
    $region19: #{tpu_custom_call.1} parent=1 // pred_check_branch
      %41 = sbr.rel (0) target = $region21
    $region20: #{tpu_custom_call.1} parent=1 // pred_region
      %42 = dma.done [#allocation7], 2048
    $region21: #{tpu_custom_call.1} parent=1 // pred_fallthru
      _
    %p43 = scmp.eq.s32.totalorder 0, 0
    // Predicated region
    $region22: #{tpu_custom_call.1} parent=1 // pred_check
      %p44 = pneg %p43
    $region23: #{tpu_custom_call.1} parent=1 // pred_check_branch
      %46 = sbr.rel (%p44) target = $region25
    $region24: #{tpu_custom_call.1} parent=1 // pred_region
      %v47 = vld [vmem:[%s2] sm:$0x1]
      %v49 = vlaneseq
      %v50 = vshrl.u32 %v49, 7
      %v51 = vsub.s32 0, %v50
      %v52 = vrot.slane %v47, %v51
      %54 = vst [vmem:[#allocation2] sm:$0xff] %v52
      %55 = vst [vmem:[#allocation2 + $0x8] sm:$0xff] %v52
    $region25: #{tpu_custom_call.1} parent=1 // pred_fallthru
      _
    %v56 = vld [vmem:[#allocation2] sm:$0xff]
    %v57 = vld [vmem:[#allocation2 + $0x8] sm:$0xff]
    %v58 = vld [vmem:[#allocation3] sm:$0xff]
    %v59 = vld [vmem:[#allocation3 + $0x8] sm:$0xff]
    %v60 = vld [vmem:[#allocation6] sm:$0xff]
    %v61 = vld [vmem:[#allocation6 + $0x8] sm:$0xff]
    %v62 = vld [vmem:[#allocation6 + $0x10] sm:$0xff]
    %v63 = vld [vmem:[#allocation6 + $0x18] sm:$0xff]
    %v64 = vld [vmem:[#allocation6 + $0x20] sm:$0xff]
    %v65 = vld [vmem:[#allocation6 + $0x28] sm:$0xff]
    %v66 = vld [vmem:[#allocation6 + $0x30] sm:$0xff]
    %v67 = vld [vmem:[#allocation6 + $0x38] sm:$0xff]
    %v68 = vld [vmem:[#allocation6 + $0x40] sm:$0xff]
    %v69 = vld [vmem:[#allocation6 + $0x48] sm:$0xff]
    %v70 = vld [vmem:[#allocation6 + $0x50] sm:$0xff]
    %v71 = vld [vmem:[#allocation6 + $0x58] sm:$0xff]
    %v72 = vld [vmem:[#allocation6 + $0x60] sm:$0xff]
    %v73 = vld [vmem:[#allocation6 + $0x68] sm:$0xff]
    %v74 = vld [vmem:[#allocation6 + $0x70] sm:$0xff]
    %v75 = vld [vmem:[#allocation6 + $0x78] sm:$0xff]
    %76 = vmatprep.subr.mxu0 0.0
    %77 = vmatpush1.xpose.msra.mxu0 %v75
    %78 = vmatprep.subr.mxu0 0.0
    %79 = vmatpush1.xpose.msra.mxu0 %v74
    %80 = vmatprep.subr.mxu0 0.0
    %81 = vmatpush1.xpose.msra.mxu0 %v73
    %82 = vmatprep.subr.mxu0 0.0
    %83 = vmatpush1.xpose.msra.mxu0 %v72
    %84 = vmatprep.subr.mxu0 0.0
    %85 = vmatpush1.xpose.msra.mxu0 %v71
    %86 = vmatprep.subr.mxu0 0.0
    %87 = vmatpush1.xpose.msra.mxu0 %v70
    %88 = vmatprep.subr.mxu0 0.0
    %89 = vmatpush1.xpose.msra.mxu0 %v69
    %90 = vmatprep.subr.mxu0 0.0
    %91 = vmatpush1.xpose.msra.mxu0 %v68
    %92 = vmatprep.subr.mxu0 0.0
    %93 = vmatpush1.xpose.msra.mxu0 %v67
    %94 = vmatprep.subr.mxu0 0.0
    %95 = vmatpush1.xpose.msra.mxu0 %v66
    %96 = vmatprep.subr.mxu0 0.0
    %97 = vmatpush1.xpose.msra.mxu0 %v65
    %98 = vmatprep.subr.mxu0 0.0
    %99 = vmatpush1.xpose.msra.mxu0 %v64
    %100 = vmatprep.subr.mxu0 0.0
    %101 = vmatpush1.xpose.msra.mxu0 %v63
    %102 = vmatprep.subr.mxu0 0.0
    %103 = vmatpush1.xpose.msra.mxu0 %v62
    %104 = vmatprep.subr.mxu0 0.0
    %105 = vmatpush1.xpose.msra.mxu0 %v61
    %106 = vmatprep.subr.mxu0 0.0
    %107 = vmatpush1.xpose.msra.mxu0 %v60
    %108 = vmatprep.subr.mxu0 0.0
    %109 = vmatpush2.xpose.msra.mxu0 0.0
    %110 = vmatprep.subr.mxu0 0.0
    %111 = vmatpush2.xpose.msra.mxu0 0.0
    %112 = vmatprep.subr.mxu0 0.0
    %113 = vmatpush2.xpose.msra.mxu0 0.0
    %114 = vmatprep.subr.mxu0 0.0
    %115 = vmatpush2.xpose.msra.mxu0 0.0
    %116 = vmatprep.subr.mxu0 0.0
    %117 = vmatpush2.xpose.msra.mxu0 0.0
    %118 = vmatprep.subr.mxu0 0.0
    %119 = vmatpush2.xpose.msra.mxu0 0.0
    %120 = vmatprep.subr.mxu0 0.0
    %121 = vmatpush2.xpose.msra.mxu0 0.0
    %122 = vmatprep.subr.mxu0 0.0
    %123 = vmatpush2.xpose.msra.mxu0 0.0
    %124 = vmatprep.subr.mxu0 0.0
    %125 = vmatpush2.xpose.msra.mxu0 0.0
    %126 = vmatprep.subr.mxu0 0.0
    %127 = vmatpush2.xpose.msra.mxu0 0.0
    %128 = vmatprep.subr.mxu0 0.0
    %129 = vmatpush2.xpose.msra.mxu0 0.0
    %130 = vmatprep.subr.mxu0 0.0
    %131 = vmatpush2.xpose.msra.mxu0 0.0
    %132 = vmatprep.subr.mxu0 0.0
    %133 = vmatpush2.xpose.msra.mxu0 0.0
    %134 = vmatprep.subr.mxu0 0.0
    %135 = vmatpush2.xpose.msra.mxu0 0.0
    %136 = vmatprep.subr.mxu0 0.0
    %137 = vmatpush2.xpose.msra.mxu0 0.0
    %138 = vmatprep.subr.mxu0 0.0
    %139 = vmatpush2.xpose.msra.mxu0 0.0
    %140 = vmatprep.mubr.f32.mxu0 0.0
    %141 = vmatmul.mubr.f32.gmra.mxu0 %v58
    %v142 = vpop.f32.mrf.mxu0
    %v143 = vadd.f32 0.0, %v142
    %v144 = vpop.f32.mrf.mxu0
    %145 = vmatprep.mubr.f32.mxu0 0.0
    %146 = vmatmul.mubr.f32.gmra.mxu0 %v59
    %v147 = vpop.f32.mrf.mxu0
    %v148 = vadd.f32 0.0, %v147
    %v149 = vpop.f32.mrf.mxu0
    %150 = vdwg.mxu0
    %v151 = vadd.f32 %v56, %v143
    %v152 = vadd.f32 %v57, %v148
    %153 = vst [vmem:[#allocation2] sm:$0xff] %v151
    %154 = vst [vmem:[#allocation2 + $0x8] sm:$0xff] %v152
    // Predicated region
    $region26: #{tpu_custom_call.1} parent=1 // pred_check
      %p155 = pneg %p43
    $region27: #{tpu_custom_call.1} parent=1 // pred_check_branch
      %157 = sbr.rel (%p155) target = $region29
    $region28: #{tpu_custom_call.1} parent=1 // pred_region
      %v158 = vld [vmem:[#allocation2] sm:$0xff]
      %v159 = vld [vmem:[#allocation2 + $0x8] sm:$0xff]
      %160 = vst [vmem:[#allocation8] sm:$0xff] %v158
      %161 = vst [vmem:[#allocation8 + $0x8] sm:$0xff] %v159
    $region29: #{tpu_custom_call.1} parent=1 // pred_fallthru
      _
    // Predicated region
    $region30: #{tpu_custom_call.1} parent=1 // pred_check
      _
    $region31: #{tpu_custom_call.1} parent=1 // pred_check_branch
      %163 = sbr.rel (0) target = $region33
    $region32: #{tpu_custom_call.1} parent=1 // pred_region
      %s165 = ssub.s32 256, 256
      %166 = vsyncadd [#allocation5], %s165
      %s167 = sshll.u32 [#allocation8], 4
      %s168 = int_to_ptr.vmem [resolvable:$true] %s167
      %173 = dma.vmem_to_hbm [thread:$0]  %s168, 256, %s3, [#allocation5], 128, 128, 8
    $region33: #{tpu_custom_call.1} parent=1 // pred_fallthru
      _
    // Predicated region
    $region34: #{tpu_custom_call.1} parent=1 // pred_check
      _
    $region35: #{tpu_custom_call.1} parent=1 // pred_check_branch
      %175 = sbr.rel (0) target = $region37
    $region36: #{tpu_custom_call.1} parent=1 // pred_region
      %176 = dma.done [#allocation5], 256
    $region37: #{tpu_custom_call.1} parent=1 // pred_fallthru
      _
    %177 = vsyncpa [#allocation4], 1
    %178 = vsyncpa [#allocation7], 1
    %179 = vsyncpa [#allocation5], 1

</llo_original>
